<compile_context>
chip_gen: v6e
topology: v6e:2x2x1
jax: 0.10.0
libtpu: 0.0.40
codegen_flags: <defaults>
</compile_context>

<pallas_src>
import functools

import jax
import jax.numpy as jnp
from jax.experimental import pallas as pl
from jax.experimental.pallas import tpu as pltpu


# ----------------------------------------------------------------------------
# Pallas kernel: one (batch, spatial-tile) block of the transposed im2col matmul,
# fused with LeakyReLU.
#   w_ref : (F, K)      bf16 -- reshaped conv weight (resident across grid steps)
#   p_ref : (1, K, TS)  bf16 -- im2col columns for this tile (positions on lanes)
#   o_ref : (1, F, TS)  f32  -- activated output, lane-dense along TS
# ----------------------------------------------------------------------------
def _conv_lrelu_kernel(w_ref, p_ref, o_ref, *, alpha):
    acc = jnp.dot(w_ref[...], p_ref[0], preferred_element_type=jnp.float32)
    o_ref[0] = jnp.where(acc >= 0, acc, alpha * acc).astype(o_ref.dtype)


def _im2col_3d_nks(x, kernel_size, strides):
    """x: (N, C, D, H, W) -> patches (N, C*kD*kH*kW, Do*Ho*Wo), out spatial dims.

    Feature (row) order is C outer then kD, kH, kW -- matching weight.reshape(F, K).
    Position (column) order is Do, Ho, Wo row-major.
    """
    N, C, D, H, W = x.shape
    kD, kH, kW = kernel_size
    sD, sH, sW = strides
    Do = (D - kD) // sD + 1
    Ho = (H - kH) // sH + 1
    Wo = (W - kW) // sW + 1
    K = C * kD * kH * kW
    S = Do * Ho * Wo

    if (sD, sH, sW) == (kD, kH, kW) and (D, H, W) == (Do * kD, Ho * kH, Wo * kW):
        # Non-overlapping "pooling" conv: im2col is a pure reshape/transpose.
        p = x.reshape(N, C, Do, kD, Ho, kH, Wo, kW)
        p = p.transpose(0, 1, 3, 5, 7, 2, 4, 6)    # (N, C, kD, kH, kW, Do, Ho, Wo)
    else:
        cols = []
        for dz in range(kD):
            for dy in range(kH):
                for dx in range(kW):
                    cols.append(x[:, :,
                                  dz:dz + sD * Do:sD,
                                  dy:dy + sH * Ho:sH,
                                  dx:dx + sW * Wo:sW])   # (N, C, Do, Ho, Wo)
        p = jnp.stack(cols, axis=2)                      # (N, C, kD*kH*kW, Do, Ho, Wo)
        p = p.reshape(N, C, kD, kH, kW, Do, Ho, Wo)

    patches = p.reshape(N, K, S)
    return patches, (Do, Ho, Wo)


def _choose_ts(S, K, F, n_batch, target_ts=2048, vmem_budget_bytes=12 * 1024 * 1024):
    """Pick the spatial tile: largest 128-multiple divisor of S within the VMEM budget.

    Prefers leaving >= 2 total grid steps (megacore sharding / pipeline overlap). If S
    is not a multiple of 128, fall back to a single full-extent block (always legal).
    """
    if S % 128 != 0:
        return S

    def fits(t):
        # double-buffered bf16 patch tile + double-buffered f32 out tile + resident
        # bf16 weight (accumulation happens in registers; no scratch).
        return t * (2 * K * 2 + 2 * F * 4) + F * K * 2 <= vmem_budget_bytes

    candidates = [t for t in range(128, min(target_ts, S) + 1, 128)
                  if S % t == 0 and fits(t)]
    if not candidates:
        return 128
    multi_step = [t for t in candidates if n_batch * (S // t) >= 2]
    return max(multi_step) if multi_step else max(candidates)


def pooling_conv_forward(x, weight, *, strides, lrelu_alpha, target_ts=2048):
    """Conv3d (no bias, VALID padding) + LeakyReLU.

    x      : (N, C, D, H, W) float32
    weight : (F, C, kD, kH, kW) float32
    returns: (N, F, Do, Ho, Wo) float32
    """
    N, C, D, H, W = x.shape
    F, Cw, kD, kH, kW = weight.shape
    assert C == Cw

    patches, (Do, Ho, Wo) = _im2col_3d_nks(x, (kD, kH, kW), strides)
    _, K, S = patches.shape

    # bf16 feed to the MXU (bf16-native on v5e/v6e/v7x), f32 accumulation in-kernel.
    patches = patches.astype(jnp.bfloat16)
    w_mat = weight.reshape(F, K).astype(jnp.bfloat16)

    ts = _choose_ts(S, K, F, N, target_ts=target_ts)
    grid = (N, S // ts)

    kernel = functools.partial(_conv_lrelu_kernel, alpha=float(lrelu_alpha))

    out = pl.pallas_call(
        kernel,
        out_shape=jax.ShapeDtypeStruct((N, F, S), jnp.float32),
        grid_spec=pltpu.PrefetchScalarGridSpec(
            num_scalar_prefetch=0,
            grid=grid,
            in_specs=[
                pl.BlockSpec((F, K), lambda n, j: (0, 0)),       # weight, resident
                pl.BlockSpec((1, K, ts), lambda n, j: (n, 0, j)),  # patches, lane-dense
            ],
            out_specs=pl.BlockSpec((1, F, ts), lambda n, j: (n, 0, j)),
        ),
        compiler_params=pltpu.CompilerParams(
            dimension_semantics=("parallel", "parallel"),
            vmem_limit_bytes=32 * 1024 * 1024,
        ),
    )(w_mat, patches)

    return out.reshape(N, F, Do, Ho, Wo)   # pure reshape, no transpose


if __name__ == "__main__":
    # Module config (synthetic, deterministic init).
    in_channels = 4
    filters = 8
    kernel_size = (2, 2, 2)
    strides = (2, 2, 2)
    lrelu_alpha = 0.2

    key = jax.random.PRNGKey(0)
    kx, kw = jax.random.split(key)

    # Input: N=2, C=4, D=H=W=16 -> output (2, 8, 8, 8, 8); per-batch S = 512.
    x = jax.random.normal(kx, (2, in_channels, 16, 16, 16), dtype=jnp.float32)
    weight = 0.1 * jax.random.normal(
        kw, (filters, in_channels) + kernel_size, dtype=jnp.float32)

    out = pooling_conv_forward(x, weight, strides=strides, lrelu_alpha=lrelu_alpha)
    out = jax.block_until_ready(out)
    assert out.shape == (2, filters, 8, 8, 8), out.shape

    # Tight check: f32 reference conv on the same bf16-rounded inputs the kernel
    # actually feeds to the MXU (kernel accumulates in f32).
    x_r = x.astype(jnp.bfloat16).astype(jnp.float32)
    w_r = weight.astype(jnp.bfloat16).astype(jnp.float32)
    ref = jax.lax.conv_general_dilated(
        x_r, w_r, window_strides=strides, padding="VALID",
        dimension_numbers=("NCDHW", "OIDHW", "NCDHW"),
        precision=jax.lax.Precision.HIGHEST)
    ref = jnp.where(ref >= 0, ref, lrelu_alpha * ref)
    assert jnp.allclose(out, ref, atol=1e-4, rtol=1e-4), \
        float(jnp.max(jnp.abs(out - ref)))

    # Loose check against the pure-f32 module semantics (bf16 input cast is the
    # only deviation).
    ref32 = jax.lax.conv_general_dilated(
        x, weight, window_strides=strides, padding="VALID",
        dimension_numbers=("NCDHW", "OIDHW", "NCDHW"),
        precision=jax.lax.Precision.HIGHEST)
    ref32 = jnp.where(ref32 >= 0, ref32, lrelu_alpha * ref32)
    assert jnp.allclose(out, ref32, atol=5e-2, rtol=5e-2)

    print("KERNEL_OK")
</pallas_src>

<mosaic_0001>
module attributes {stable_mosaic.version = 11 : i64} {
  func.func @_conv_lrelu_kernel(%arg0: i32, %arg1: i32, %arg2: memref<8x32xbf16, #tpu.memory_space<vmem>>, %arg3: memref<1x32x512xbf16, #tpu.memory_space<vmem>>, %arg4: memref<1x8x512xf32, #tpu.memory_space<vmem>>) attributes {dimension_semantics = [#tpu.dimension_semantics<parallel>, #tpu.dimension_semantics<parallel>], iteration_bounds = array<i64: 2, 1>, scalar_prefetch = 0 : i64, scratch_operands = 0 : i64, tpu.core_type = #tpu.core_type<tc>, window_params = [{pipeline_mode = #tpu.pipeline_mode<synchronous>, transform_indices = @transform_0, window_bounds = array<i64: 8, 32>}, {transform_indices = @transform_1, window_bounds = array<i64: 1, 32, 512>}, {transform_indices = @transform_2, window_bounds = array<i64: 1, 8, 512>}]} {
    %c0 = arith.constant 0 : index
    %c0_0 = arith.constant 0 : index
    %0 = vector.load %arg2[%c0, %c0_0] : memref<8x32xbf16, #tpu.memory_space<vmem>>, vector<8x32xbf16>
    %c0_1 = arith.constant 0 : index
    %c0_2 = arith.constant 0 : index
    %c0_3 = arith.constant 0 : index
    %1 = vector.load %arg3[%c0_1, %c0_2, %c0_3] : memref<1x32x512xbf16, #tpu.memory_space<vmem>>, vector<1x32x512xbf16>
    %2 = vector.shape_cast %1 : vector<1x32x512xbf16> to vector<32x512xbf16>
    %cst = arith.constant dense<0.000000e+00> : vector<8x512xf32>
    %3 = tpu.matmul %0, %2, %cst {dimension_numbers = #tpu.dot_dimension_numbers<[1], [0], [0], [1], [0, 0, 1, 1], [], []>} : vector<8x32xbf16>, vector<32x512xbf16>, vector<8x512xf32> -> vector<8x512xf32>
    %cst_4 = arith.constant 0.000000e+00 : f32
    %4 = vector.broadcast %cst_4 : f32 to vector<8x512xf32>
    %5 = arith.cmpf oge, %3, %4 : vector<8x512xf32>
    %cst_5 = arith.constant 2.000000e-01 : f32
    %6 = vector.broadcast %cst_5 : f32 to vector<8x512xf32>
    %7 = arith.mulf %6, %3 : vector<8x512xf32>
    %8 = arith.select %5, %3, %7 : vector<8x512xi1>, vector<8x512xf32>
    %c0_6 = arith.constant 0 : index
    %c0_7 = arith.constant 0 : index
    %c0_8 = arith.constant 0 : index
    %9 = vector.load %arg4[%c0_6, %c0_7, %c0_8] : memref<1x8x512xf32, #tpu.memory_space<vmem>>, vector<1x8x512xf32>
    %10 = vector.shape_cast %9 : vector<1x8x512xf32> to vector<8x512xf32>
    %11 = vector.shape_cast %8 : vector<8x512xf32> to vector<1x8x512xf32>
    tpu.vector_store %arg4[%c0_6, %c0_7, %c0_8], %11 {strides = array<i32>} : memref<1x8x512xf32, #tpu.memory_space<vmem>>, vector<1x8x512xf32>,
    return
  }
  func.func @transform_0(%arg0: i32, %arg1: i32) -> (i32, i32) {
    %c0_i32 = arith.constant 0 : i32
    %c0_i32_0 = arith.constant 0 : i32
    %c0_i32_1 = arith.constant 0 : i32
    return %c0_i32, %c0_i32_0 : i32, i32
  }
  func.func @transform_1(%arg0: i32, %arg1: i32) -> (i32, i32, i32) {
    %c0_i32 = arith.constant 0 : i32
    %c0_i32_0 = arith.constant 0 : i32
    return %arg0, %c0_i32, %arg1 : i32, i32, i32
  }
  func.func @transform_2(%arg0: i32, %arg1: i32) -> (i32, i32, i32) {
    %c0_i32 = arith.constant 0 : i32
    %c0_i32_0 = arith.constant 0 : i32
    return %arg0, %c0_i32, %arg1 : i32, i32, i32
  }
}

</mosaic_0001>

<llo_original>
// kernel: tpu_custom_call.1
$region0: #{tpu_custom_call.1}
  #allocation0 [shape = 'u32[]', space=smem, size = 0x4, offset = 0x4, fixed_abs, tag = 'smem constant byte address 0x4 - core index']
  #allocation1 [shape = 'u32[144,128]{1,0:T(1,128)}', space=vmem, size = 0x12000, scoped, tag = 'internal scratch']
  %s0 = inlined_call_operand.hbm [shape: bf16[8,32], index: 0, kind: input, shape index: {}]
  %s1 = inlined_call_operand.hbm [shape: bf16[2,32,512], index: 1, kind: input, shape index: {}]
  %s2 = inlined_call_operand.hbm [shape: f32[2,8,512], index: 2, kind: output, shape index: {}]
  %s3 = sld [smem:[#allocation0]]
  $region49: #{tpu_custom_call.1} parent=0
    _
  %s5 = ssub.s32 1, %s3
  %s6 = scalar_select 0, %s5, %s3
  $region1: #{tpu_custom_call.1} parent=0
    #allocation2 [shape = 'u8[2048]{0}', space=vmem, size = 0x800, scoped, tag = 'input window, operand 0, single buffered']
    #allocation3 [shape = 's32[2]{0}', space=sflag, size = 0x8, scoped, tag = 'scoped memory for tpu_custom_call.1']
    #allocation4 [shape = 's32[2]{0}', space=sflag, size = 0x8, scoped, tag = 'scoped memory for tpu_custom_call.1']
    #allocation5 [shape = 'u8[65536]{0}', space=vmem, size = 0x10000, scoped, tag = 'input window, operand 1']
    #allocation6 [shape = 's32[2]{0}', space=sflag, size = 0x8, scoped, tag = 'scoped memory for tpu_custom_call.1']
    #allocation7 [shape = 'u8[32768]{0}', space=vmem, size = 0x8000, scoped, tag = 'output window, operand 0']
    %7 = vsyncpa [#allocation3], 0
    %8 = vsyncpa [#allocation6], 0
    %s9 = scalar_lea.sflag [#allocation6], 1
    %10 = vsyncpa %s9, 0
    %11 = vsyncpa [#allocation4], 0
    %s12 = scalar_lea.sflag [#allocation4], 1
    %13 = vsyncpa %s12, 0
    loop: start=0, step=1, limit=4
    $region2: #{tpu_custom_call.1} parent=1 // loop_pre_header
      _
    $region3: #{tpu_custom_call.1} parent=1 // loop_header
      %s15 = sphi 0, %s19
      %p16 = scmp.ge.s32.totalorder %s15, 4
      %s22 = sphi 0, %s34
      %s23 = sphi 0, %s30
      %s24 = sphi 0, %s22
      %s25 = sphi 0, %s23
      %s26 = sphi 0, %s24
      %s27 = sphi 0, %s25
      %s35 = sphi 0, %s35
      %s37 = sphi 0, %s35
      %s38 = sphi 0, %s37
      %s52 = sphi 0, %s38
      %s60 = sphi 0, %s62
      %s63 = sphi 0, %s60
      %s64 = sphi 0, %s63
      %s80 = sphi 0, %s64
      %s88 = sphi 0, %s90
      %s91 = sphi 0, %s88
      %s92 = sphi 0, %s91
      %s108 = sphi 0, %s92
    $region4: #{tpu_custom_call.1} parent=1 // loop_header_branch
      %18 = sbr.rel (%p16) target = $region8
    $region5: #{tpu_custom_call.1} parent=1 // loop_body
      %s20 = ssub.s32 %s15, 1
      %s21 = ssub.s32 %s15, 2
      %s28 = sadd.s32 1, %s23
      %p29 = scmp.ge.s32.totalorder %s28, 1
      %s30 = scalar_select %p29, 0, %s28
      %s31 = sadd.s32 1, %s22
      %s32 = scalar_select %p29, %s31, %s22
      %p33 = scmp.ge.s32.totalorder %s32, 2
      %s34 = scalar_select %p33, 0, %s32
      %s36 = sadd.s32 %s35, 1
      %p39 = scmp.eq.s32.totalorder %s15, 1
      %p40 = scmp.ne.s32.totalorder %s35, %s37
      %p41 = scmp.eq.s32.totalorder %s15, 0
      %p42 = por %p40, %p41
      %p43 = scmp.ne.s32.totalorder %s35, %s37
      %p44 = scmp.eq.s32.totalorder %s20, 1
      %p45 = por %p43, %p44
      %p46 = scmp.ne.s32.totalorder %s37, %s38
      %p47 = scmp.eq.s32.totalorder %s20, 0
      %p48 = por %p46, %p47
      %p49 = scmp.ne.s32.totalorder %s37, %s38
      %p50 = scmp.eq.s32.totalorder %s21, 1
      %p51 = por %p49, %p50
      %p53 = scmp.ne.s32.totalorder %s38, %s52
      %p54 = scmp.eq.s32.totalorder %s21, 0
      %p55 = por %p53, %p54
      %s56 = ssub.s32 %s22, %s34
      %s57 = ssub.s32 %s23, %s30
      %s58 = sor.u32 %s56, %s57
      %p59 = scmp.eq.s32.totalorder %s58, 0
      %s61 = sadd.s32 %s60, 1
      %s62 = scalar_select %p59, %s60, %s61
      %p65 = pneg %p59
      %p66 = scmp.eq.s32.totalorder %s15, 1
      %p67 = por %p65, %p66
      %p68 = scmp.ne.s32.totalorder %s60, %s63
      %p69 = scmp.eq.s32.totalorder %s15, 0
      %p70 = por %p68, %p69
      %p71 = scmp.ne.s32.totalorder %s60, %s63
      %p72 = scmp.eq.s32.totalorder %s20, 1
      %p73 = por %p71, %p72
      %p74 = scmp.ne.s32.totalorder %s63, %s64
      %p75 = scmp.eq.s32.totalorder %s20, 0
      %p76 = por %p74, %p75
      %p77 = scmp.ne.s32.totalorder %s63, %s64
      %p78 = scmp.eq.s32.totalorder %s21, 1
      %p79 = por %p77, %p78
      %p81 = scmp.ne.s32.totalorder %s64, %s80
      %p82 = scmp.eq.s32.totalorder %s21, 0
      %p83 = por %p81, %p82
      %s84 = ssub.s32 %s22, %s34
      %s85 = ssub.s32 %s23, %s30
      %s86 = sor.u32 %s84, %s85
      %p87 = scmp.eq.s32.totalorder %s86, 0
      %s89 = sadd.s32 %s88, 1
      %s90 = scalar_select %p87, %s88, %s89
      %p93 = pneg %p87
      %p94 = scmp.eq.s32.totalorder %s15, 1
      %p95 = por %p93, %p94
      %p96 = scmp.ne.s32.totalorder %s88, %s91
      %p97 = scmp.eq.s32.totalorder %s15, 0
      %p98 = por %p96, %p97
      %p99 = scmp.ne.s32.totalorder %s88, %s91
      %p100 = scmp.eq.s32.totalorder %s20, 1
      %p101 = por %p99, %p100
      %p102 = scmp.ne.s32.totalorder %s91, %s92
      %p103 = scmp.eq.s32.totalorder %s20, 0
      %p104 = por %p102, %p103
      %p105 = scmp.ne.s32.totalorder %s91, %s92
      %p106 = scmp.eq.s32.totalorder %s21, 1
      %p107 = por %p105, %p106
      %p109 = scmp.ne.s32.totalorder %s92, %s108
      %p110 = scmp.eq.s32.totalorder %s21, 0
      %p111 = por %p109, %p110
      %p112 = scmp.le.s32.totalorder 1, %s15
      %p113 = scmp.lt.s32.totalorder %s15, 3
      %p114 = pnand %p112, %p113
      %p115 = pneg %p114
      // Predicated region
      $region9: #{tpu_custom_call.1} parent=5 // pred_check
        _
      $region10: #{tpu_custom_call.1} parent=5 // pred_check_branch
        %117 = sbr.rel (%p114) target = $region12
      $region11: #{tpu_custom_call.1} parent=5 // pred_region
        %s118 = ssub.s32 %s15, 1
        // Predicated region
        $region13: #{tpu_custom_call.1} parent=11 // pred_check
          %p119 = pneg %p48
        $region14: #{tpu_custom_call.1} parent=11 // pred_check_branch
          %121 = sbr.rel (%p119) target = $region16
        $region15: #{tpu_custom_call.1} parent=11 // pred_region
          %s123 = ssub.s32 64, 64
          %124 = vsyncadd [#allocation3], %s123
          %s126 = sshll.u32 [#allocation2], 4
          %s127 = int_to_ptr.vmem [resolvable:$true] %s126
          %129 = dma.hbm_to_vmem [thread:$0]  %s0, 64, %s127, [#allocation3]
        $region16: #{tpu_custom_call.1} parent=11 // pred_fallthru
          _
      $region12: #{tpu_custom_call.1} parent=5 // pred_fallthru
        _
      %p130 = scmp.lt.s32.totalorder %s15, 2
      // Predicated region
      $region17: #{tpu_custom_call.1} parent=5 // pred_check
        %p131 = pneg %p130
      $region18: #{tpu_custom_call.1} parent=5 // pred_check_branch
        %133 = sbr.rel (%p131) target = $region20
      $region19: #{tpu_custom_call.1} parent=5 // pred_region
        // Predicated region
        $region21: #{tpu_custom_call.1} parent=19 // pred_check
          %p134 = pneg %p70
        $region22: #{tpu_custom_call.1} parent=19 // pred_check_branch
          %136 = sbr.rel (%p134) target = $region24
        $region23: #{tpu_custom_call.1} parent=19 // pred_region
          %s137 = sand.u32 %s60, 1
          %s138 = scalar_lea.sflag [#allocation6], %s137
          %s139 = sand.u32 %s60, 1
          %s140 = smul.addr %s139, 64
          %s141 = scalar_lea.vmem [#allocation5], %s140
          %s142 = smul.u32 4, %s23
          %s144 = ssub.s32 1024, 1024
          %145 = vsyncadd %s138, %s144
          %s146 = smul.addr %s22, 16
          %s147 = sadd.s32 %s142, %s146
          %s148 = smul.addr %s147, 64
          %s149 = scalar_lea.hbm %s1, %s148
          %s150 = sshll.u32 %s141, 4
          %s151 = int_to_ptr.vmem [resolvable:$true] %s150
          %156 = dma.hbm_to_vmem [thread:$0]  %s149, 1024, %s151, %s138, 256, 256, 16
        $region24: #{tpu_custom_call.1} parent=19 // pred_fallthru
          _
      $region20: #{tpu_custom_call.1} parent=5 // pred_fallthru
        _
      %p157 = scmp.le.s32.totalorder 1, %s15
      %p158 = scmp.lt.s32.totalorder %s15, 3
      %p159 = pnand %p157, %p158
      %p160 = pneg %p159
      // Predicated region
      $region25: #{tpu_custom_call.1} parent=5 // pred_check
        _
      $region26: #{tpu_custom_call.1} parent=5 // pred_check_branch
        %162 = sbr.rel (%p159) target = $region28
      $region27: #{tpu_custom_call.1} parent=5 // pred_region
        %s163 = ssub.s32 %s15, 1
        // Predicated region
        $region29: #{tpu_custom_call.1} parent=27 // pred_check
          %p164 = pneg %p48
        $region30: #{tpu_custom_call.1} parent=27 // pred_check_branch
          %166 = sbr.rel (%p164) target = $region32
        $region31: #{tpu_custom_call.1} parent=27 // pred_region
          %167 = dma.done [#allocation3], 64
        $region32: #{tpu_custom_call.1} parent=27 // pred_fallthru
          _
        %s168 = sand.u32 %s63, 1
        %s169 = scalar_lea.sflag [#allocation6], %s168
        %s170 = sand.u32 %s63, 1
        %s171 = smul.addr %s170, 64
        %s172 = scalar_lea.vmem [#allocation5], %s171
        // Predicated region
        $region33: #{tpu_custom_call.1} parent=27 // pred_check
          %p173 = pneg %p76
        $region34: #{tpu_custom_call.1} parent=27 // pred_check_branch
          %175 = sbr.rel (%p173) target = $region36
        $region35: #{tpu_custom_call.1} parent=27 // pred_region
          %176 = dma.done %s169, 1024
        $region36: #{tpu_custom_call.1} parent=27 // pred_fallthru
          _
        %p177 = pneg %p48
        %p178 = pneg %p45
        %s179 = sand.u32 %s63, 1
        %s180 = scalar_lea.sflag [#allocation6], %s179
        %s181 = sand.u32 %s63, 1
        %s182 = smul.addr %s181, 64
        %s183 = scalar_lea.vmem [#allocation5], %s182
        %p184 = pneg %p76
        %p185 = pneg %p73
        %p186 = pneg %p104
        %p187 = pneg %p101
        %s188 = sand.u32 %s91, 1
        %s189 = scalar_lea.sflag [#allocation4], %s188
        %s190 = sand.u32 %s91, 1
        %s191 = smul.addr %s190, 32
        %s192 = scalar_lea.vmem [#allocation7], %s191
        %s193 = smul.u32 4, %s25
        %s194 = smul.u32 4, %s25
        %v196 = vld [vmem:[#allocation2] sm:$0xf]
        %v197 = vld [vmem:[%s172] sm:$0xff]
        %v198 = vld [vmem:[%s172 + $0x8] sm:$0xff]
        %v199 = vld [vmem:[%s172 + $0x10] sm:$0xff]
        %v200 = vld [vmem:[%s172 + $0x18] sm:$0xff]
        %v201 = vld [vmem:[%s172 + $0x20] sm:$0xff]
        %v202 = vld [vmem:[%s172 + $0x28] sm:$0xff]
        %v203 = vld [vmem:[%s172 + $0x30] sm:$0xff]
        %v204 = vld [vmem:[%s172 + $0x38] sm:$0xff]
        %v213 = vunpack.c.l.b16 %v197
        %v214 = vunpack.c.h.b16 %v197
        %v215 = vunpack.c.l.b16 %v198
        %v216 = vunpack.c.h.b16 %v198
        %v217 = vunpack.c.l.b16 %v199
        %v218 = vunpack.c.h.b16 %v199
        %v219 = vunpack.c.l.b16 %v200
        %v220 = vunpack.c.h.b16 %v200
        %v221 = vunpack.c.l.b16 %v201
        %v222 = vunpack.c.h.b16 %v201
        %v223 = vunpack.c.l.b16 %v202
        %v224 = vunpack.c.h.b16 %v202
        %v225 = vunpack.c.l.b16 %v203
        %v226 = vunpack.c.h.b16 %v203
        %v227 = vunpack.c.l.b16 %v204
        %v228 = vunpack.c.h.b16 %v204
        %v229 = vpack.c.b16 %v217, %v213
        %v230 = vpack.c.b16 %v218, %v214
        %v231 = vpack.c.b16 %v219, %v215
        %v232 = vpack.c.b16 %v220, %v216
        %v233 = vpack.c.b16 %v225, %v221
        %v234 = vpack.c.b16 %v226, %v222
        %v235 = vpack.c.b16 %v227, %v223
        %v236 = vpack.c.b16 %v228, %v224
        %vm245 = vcmask 261120
        %v247 = vsel %vm245, %v196, 0
        %249 = vmatprep.subr.bf16.mxu0 0
        %250 = vmatpush1.bf16.msra.mxu0 0
        %251 = vmatprep.subr.bf16.mxu0 0
        %252 = vmatpush1.bf16.msra.mxu0 0
        %253 = vmatprep.subr.bf16.mxu0 0
        %254 = vmatpush1.bf16.msra.mxu0 0
        %255 = vmatprep.subr.bf16.mxu0 0
        %256 = vmatpush1.bf16.msra.mxu0 0
        %257 = vmatprep.subr.bf16.mxu0 0
        %258 = vmatpush1.bf16.msra.mxu0 0
        %259 = vmatprep.subr.bf16.mxu0 0
        %260 = vmatpush1.bf16.msra.mxu0 0
        %261 = vmatprep.subr.bf16.mxu0 %v234
        %262 = vmatpush1.bf16.msra.mxu0 %v233
        %263 = vmatprep.subr.bf16.mxu0 %v230
        %264 = vmatpush1.bf16.msra.mxu0 %v229
        %265 = vmatprep.subr.bf16.mxu0 0
        %266 = vmatpush2.bf16.msra.mxu0 0
        %267 = vmatprep.subr.bf16.mxu0 0
        %268 = vmatpush2.bf16.msra.mxu0 0
        %269 = vmatprep.subr.bf16.mxu0 0
        %270 = vmatpush2.bf16.msra.mxu0 0
        %271 = vmatprep.subr.bf16.mxu0 0
        %272 = vmatpush2.bf16.msra.mxu0 0
        %273 = vmatprep.subr.bf16.mxu0 0
        %274 = vmatpush2.bf16.msra.mxu0 0
        %275 = vmatprep.subr.bf16.mxu0 0
        %276 = vmatpush2.bf16.msra.mxu0 0
        %277 = vmatprep.subr.bf16.mxu0 0
        %278 = vmatpush2.bf16.msra.mxu0 0
        %279 = vmatprep.subr.bf16.mxu0 0
        %280 = vmatpush2.bf16.msra.mxu0 0
        %281 = vmatprep.mubr.bf16.mxu0 0
        %282 = vmatmul.mubr.bf16.gmra.mxu0 %v247
        %v283 = vpop.f32.mrf.mxu0
        %v284 = vadd.f32 0.0, %v283
        %v285 = vpop.f32.mrf.mxu0
        %v286 = vadd.f32 0.0, %v285
        %v287 = vpop.f32.mrf.mxu0
        %v288 = vpop.f32.mrf.mxu0
        %289 = vdwg.mxu0
        %290 = vmatprep.subr.bf16.mxu0 0
        %291 = vmatpush1.bf16.msra.mxu0 0
        %292 = vmatprep.subr.bf16.mxu0 0
        %293 = vmatpush1.bf16.msra.mxu0 0
        %294 = vmatprep.subr.bf16.mxu0 0
        %295 = vmatpush1.bf16.msra.mxu0 0
        %296 = vmatprep.subr.bf16.mxu0 0
        %297 = vmatpush1.bf16.msra.mxu0 0
        %298 = vmatprep.subr.bf16.mxu0 0
        %299 = vmatpush1.bf16.msra.mxu0 0
        %300 = vmatprep.subr.bf16.mxu0 0
        %301 = vmatpush1.bf16.msra.mxu0 0
        %302 = vmatprep.subr.bf16.mxu0 %v236
        %303 = vmatpush1.bf16.msra.mxu0 %v235
        %304 = vmatprep.subr.bf16.mxu0 %v232
        %305 = vmatpush1.bf16.msra.mxu0 %v231
        %306 = vmatprep.subr.bf16.mxu0 0
        %307 = vmatpush2.bf16.msra.mxu0 0
        %308 = vmatprep.subr.bf16.mxu0 0
        %309 = vmatpush2.bf16.msra.mxu0 0
        %310 = vmatprep.subr.bf16.mxu0 0
        %311 = vmatpush2.bf16.msra.mxu0 0
        %312 = vmatprep.subr.bf16.mxu0 0
        %313 = vmatpush2.bf16.msra.mxu0 0
        %314 = vmatprep.subr.bf16.mxu0 0
        %315 = vmatpush2.bf16.msra.mxu0 0
        %316 = vmatprep.subr.bf16.mxu0 0
        %317 = vmatpush2.bf16.msra.mxu0 0
        %318 = vmatprep.subr.bf16.mxu0 0
        %319 = vmatpush2.bf16.msra.mxu0 0
        %320 = vmatprep.subr.bf16.mxu0 0
        %321 = vmatpush2.bf16.msra.mxu0 0
        %322 = vmatprep.mubr.bf16.mxu0 0
        %323 = vmatmul.mubr.bf16.gmra.mxu0 %v247
        %v324 = vpop.f32.mrf.mxu0
        %v325 = vadd.f32 0.0, %v324
        %v326 = vpop.f32.mrf.mxu0
        %v327 = vadd.f32 0.0, %v326
        %v328 = vpop.f32.mrf.mxu0
        %v329 = vpop.f32.mrf.mxu0
        %330 = vdwg.mxu0
        %vm331 = vcmp.ge.f32.partialorder %v284, 0.0
        %vm332 = vcmp.ge.f32.partialorder %v286, 0.0
        %vm333 = vcmp.ge.f32.partialorder %v325, 0.0
        %vm334 = vcmp.ge.f32.partialorder %v327, 0.0
        %v335 = vmul.f32 %v284, 0.2
        %v336 = vmul.f32 %v286, 0.2
        %v337 = vmul.f32 %v325, 0.2
        %v338 = vmul.f32 %v327, 0.2
        %v339 = vsel %vm331, %v284, %v335
        %v340 = vsel %vm332, %v286, %v336
        %v341 = vsel %vm333, %v325, %v337
        %v342 = vsel %vm334, %v327, %v338
        %343 = vst [vmem:[%s192] sm:$0xff] %v339
        %344 = vst [vmem:[%s192 + $0x8] sm:$0xff] %v340
        %345 = vst [vmem:[%s192 + $0x10] sm:$0xff] %v341
        %346 = vst [vmem:[%s192 + $0x18] sm:$0xff] %v342
        %s347 = sand.u32 %s91, 1
        %s348 = scalar_lea.sflag [#allocation4], %s347
        %s349 = sand.u32 %s91, 1
        %s350 = smul.addr %s349, 32
        %s351 = scalar_lea.vmem [#allocation7], %s350
        // Predicated region
        $region37: #{tpu_custom_call.1} parent=27 // pred_check
          %p352 = pneg %p101
        $region38: #{tpu_custom_call.1} parent=27 // pred_check_branch
          %354 = sbr.rel (%p352) target = $region40
        $region39: #{tpu_custom_call.1} parent=27 // pred_region
          %s355 = smul.u32 4, %s25
          %s357 = ssub.s32 512, 512
          %358 = vsyncadd %s348, %s357
          %s359 = smul.addr %s24, 4
          %s360 = sadd.s32 %s355, %s359
          %s361 = smul.addr %s360, 128
          %s362 = scalar_lea.hbm %s2, %s361
          %s364 = sshll.u32 %s351, 4
          %s365 = int_to_ptr.vmem [resolvable:$true] %s364
          %367 = dma.vmem_to_hbm [thread:$0]  %s365, 512, %s362, %s348
        $region40: #{tpu_custom_call.1} parent=27 // pred_fallthru
          _
      $region28: #{tpu_custom_call.1} parent=5 // pred_fallthru
        _
      %p368 = scmp.le.s32.totalorder 2, %s15
      // Predicated region
      $region41: #{tpu_custom_call.1} parent=5 // pred_check
        %p369 = pneg %p368
      $region42: #{tpu_custom_call.1} parent=5 // pred_check_branch
        %371 = sbr.rel (%p369) target = $region44
      $region43: #{tpu_custom_call.1} parent=5 // pred_region
        %s372 = ssub.s32 %s15, 2
        // Predicated region
        $region45: #{tpu_custom_call.1} parent=43 // pred_check
          %p373 = pneg %p107
        $region46: #{tpu_custom_call.1} parent=43 // pred_check_branch
          %375 = sbr.rel (%p373) target = $region48
        $region47: #{tpu_custom_call.1} parent=43 // pred_region
          %s376 = sand.u32 %s92, 1
          %s377 = scalar_lea.sflag [#allocation4], %s376
          %s378 = sand.u32 %s92, 1
          %s379 = smul.addr %s378, 32
          %s380 = scalar_lea.vmem [#allocation7], %s379
          %381 = dma.done %s377, 512
        $region48: #{tpu_custom_call.1} parent=43 // pred_fallthru
          _
      $region44: #{tpu_custom_call.1} parent=5 // pred_fallthru
        _
    $region6: #{tpu_custom_call.1} parent=1 // loop_footer
      %s19 = sadd.s32 1, %s15
    $region7: #{tpu_custom_call.1} parent=1 // loop_footer_branch
      %14 = sbr.rel target = $region3
    $region8: #{tpu_custom_call.1} parent=1 // loop_exit
      _
    %382 = vsyncpa [#allocation3], 1
    %s383 = scalar_lea.sflag [#allocation3], 1
    %384 = vsyncpa %s383, 1
    %385 = vsyncpa [#allocation6], 1
    %s386 = scalar_lea.sflag [#allocation6], 1
    %387 = vsyncpa %s386, 1
    %388 = vsyncpa [#allocation4], 1
    %s389 = scalar_lea.sflag [#allocation4], 1
    %390 = vsyncpa %s389, 1

</llo_original>
